<compile_context>
chip_gen: v6e
topology: v6e:2x2x1
jax: 0.10.0
libtpu: 0.0.40
codegen_flags: <defaults>
</compile_context>

<pallas_src>
import jax
import jax.numpy as jnp
from jax.experimental import pallas as pl
from jax.experimental.pallas import tpu as pltpu

_LANE = 128
_OUT = 8            # packed output width: q1 -> col 0, q2 -> col 1, rest zero
_MAX_TILE_B = 4096  # ~12-16 MiB of VMEM at this tile size; safe on v7x (64 MiB)


# --------------------------------------------------------------------------
# Kernel: fused twin-head MLP (3 matmuls + 2 ReLUs), bf16 on the MXU for the
# two big matmuls, f32 accumulation throughout.
# --------------------------------------------------------------------------
def _qnet_kernel(x_ref,
                 w1_ref, b1_ref,   # [na, P] f32 , [1, P] f32   (W1 || W4)
                 w2_ref, b2_ref,   # [P,  P] bf16, [1, P] f32   (block-diag W2 / W5)
                 w3_ref, b3_ref,   # [P, OUT] bf16, [1, OUT] f32 (W3 -> col 0, W6 -> col 1)
                 q_ref):           # [tile_b, OUT] f32
    x = x_ref[...]
    # Layer 1: K = num_actions (tiny); keep f32 for input-layer precision.
    h = jnp.dot(x, w1_ref[...], preferred_element_type=jnp.float32) + b1_ref[...]
    h = jnp.maximum(h, 0.0).astype(jnp.bfloat16)
    # Layer 2: [tile_b, P] x [P, P] — dominant MXU work, bf16 native.
    h = jnp.dot(h, w2_ref[...], preferred_element_type=jnp.float32) + b2_ref[...]
    h = jnp.maximum(h, 0.0).astype(jnp.bfloat16)
    # Layer 3: [tile_b, P] x [P, OUT].
    q = jnp.dot(h, w3_ref[...], preferred_element_type=jnp.float32) + b3_ref[...]
    q_ref[...] = q.astype(q_ref.dtype)


# --------------------------------------------------------------------------
# One-time param packing (head fusion + lane padding + [1, out] biases).
# --------------------------------------------------------------------------
def pack_qnetwork_params(params):
    w1, b1 = params["linear1"]
    w2, b2 = params["linear2"]
    w3, b3 = params["linear3"]
    w4, b4 = params["linear4"]
    w5, b5 = params["linear5"]
    w6, b6 = params["linear6"]

    num_actions, hidden = w1.shape
    h2 = 2 * hidden
    P = ((h2 + _LANE - 1) // _LANE) * _LANE        # fused hidden width, lane-padded

    W1 = jnp.zeros((num_actions, P), jnp.float32)
    W1 = W1.at[:, :hidden].set(w1).at[:, hidden:h2].set(w4)
    B1 = jnp.zeros((1, P), jnp.float32)
    B1 = B1.at[0, :hidden].set(b1).at[0, hidden:h2].set(b4)

    W2 = jnp.zeros((P, P), jnp.float32)
    W2 = W2.at[:hidden, :hidden].set(w2).at[hidden:h2, hidden:h2].set(w5)
    B2 = jnp.zeros((1, P), jnp.float32)
    B2 = B2.at[0, :hidden].set(b2).at[0, hidden:h2].set(b5)

    W3 = jnp.zeros((P, _OUT), jnp.float32)
    W3 = W3.at[:hidden, 0].set(w3[:, 0]).at[hidden:h2, 1].set(w6[:, 0])
    B3 = jnp.zeros((1, _OUT), jnp.float32)
    B3 = B3.at[0, 0].set(b3[0]).at[0, 1].set(b6[0])

    # Big matmul operands in bf16 (MXU-native); biases / layer-1 in f32.
    return {"w1": W1, "b1": B1,
            "w2": W2.astype(jnp.bfloat16), "b2": B2,
            "w3": W3.astype(jnp.bfloat16), "b3": B3}


def _pick_tile_b(B):
    """Batch-tile heuristic per perf review.

    - B <= 2048: one grid step (grid-step overhead dominates this tiny net).
    - larger B : at least 2 tiles (lets a v7x megacore shard the batch axis),
                 tile rounded to a multiple of 8, capped at _MAX_TILE_B rows.
    """
    if B <= 2048:
        return B
    half = -(-B // 2)
    return min(_MAX_TILE_B, ((half + 7) // 8) * 8)


# --------------------------------------------------------------------------
# Forward wrapper.
# --------------------------------------------------------------------------
def qnetwork_forward(action, packed):
    """action: [B, num_actions] f32.  packed: output of pack_qnetwork_params.

    Returns (q1, q2), each [B, 1] f32 — matches PyTorch QNetwork.forward.
    """
    W1, B1 = packed["w1"], packed["b1"]
    W2, B2 = packed["w2"], packed["b2"]
    W3, B3 = packed["w3"], packed["b3"]

    B, num_actions = action.shape
    P = W1.shape[1]
    OUT = W3.shape[1]

    tile_b = _pick_tile_b(B)
    n_tiles = pl.cdiv(B, tile_b)
    B_pad = n_tiles * tile_b
    if B_pad != B:
        action = jnp.pad(action, ((0, B_pad - B), (0, 0)))

    flops = 2 * B_pad * (num_actions * P + P * P + P * OUT)
    bytes_accessed = (4 * action.size
                      + 4 * (W1.size + B1.size + B2.size + B3.size)
                      + 2 * (W2.size + W3.size)
                      + 4 * B_pad * OUT)

    q = pl.pallas_call(
        _qnet_kernel,
        out_shape=jax.ShapeDtypeStruct((B_pad, OUT), jnp.float32),
        grid=(n_tiles,),
        in_specs=[
            pl.BlockSpec((tile_b, num_actions), lambda i: (i, 0)),
            pl.BlockSpec((num_actions, P), lambda i: (0, 0)),
            pl.BlockSpec((1, P), lambda i: (0, 0)),
            pl.BlockSpec((P, P), lambda i: (0, 0)),
            pl.BlockSpec((1, P), lambda i: (0, 0)),
            pl.BlockSpec((P, OUT), lambda i: (0, 0)),
            pl.BlockSpec((1, OUT), lambda i: (0, 0)),
        ],
        out_specs=pl.BlockSpec((tile_b, OUT), lambda i: (i, 0)),
        compiler_params=pltpu.CompilerParams(
            dimension_semantics=("parallel",),
            vmem_limit_bytes=40 * 1024 * 1024),
        cost_estimate=pl.CostEstimate(
            flops=flops, transcendentals=0, bytes_accessed=bytes_accessed),
    )(action, W1, B1, W2, B2, W3, B3)

    q = q[:B]
    return q[:, 0:1], q[:, 1:2]


# --------------------------------------------------------------------------
# Init (matches torch xavier_uniform_ + constant_(bias, 0)) and reference.
# --------------------------------------------------------------------------
def _xavier_uniform(key, fan_in, fan_out, gain=1.0):
    a = gain * jnp.sqrt(6.0 / (fan_in + fan_out))
    return jax.random.uniform(key, (fan_in, fan_out), jnp.float32, -a, a)


def init_qnetwork_params(key, num_actions, hidden_dim):
    dims = {
        "linear1": (num_actions, hidden_dim),
        "linear2": (hidden_dim, hidden_dim),
        "linear3": (hidden_dim, 1),
        "linear4": (num_actions, hidden_dim),
        "linear5": (hidden_dim, hidden_dim),
        "linear6": (hidden_dim, 1),
    }
    params = {}
    keys = jax.random.split(key, len(dims))
    for k, (name, (fi, fo)) in zip(keys, dims.items()):
        w = _xavier_uniform(k, fi, fo)        # stored [in, out]
        b = jnp.zeros((fo,), jnp.float32)     # constant_(bias, 0)
        params[name] = (w, b)
    return params


def _reference_forward(action, params):
    def lin(x, name):
        w, b = params[name]
        return x @ w + b
    xu = 1.0 * action
    x1 = jax.nn.relu(lin(xu, "linear1"))
    x1 = jax.nn.relu(lin(x1, "linear2"))
    x1 = lin(x1, "linear3")
    x2 = jax.nn.relu(lin(xu, "linear4"))
    x2 = jax.nn.relu(lin(x2, "linear5"))
    x2 = lin(x2, "linear6")
    return x1, x2


if __name__ == "__main__":
    num_actions, hidden_dim, batch = 4, 32, 8
    # bf16 matmul operands (f32 accumulation) -> loosened tolerance vs f32 ref.
    ATOL, RTOL = 3e-2, 3e-2

    key = jax.random.PRNGKey(0)
    k_params, k_action, k_mid, k_big = jax.random.split(key, 4)
    params = init_qnetwork_params(k_params, num_actions, hidden_dim)
    packed = pack_qnetwork_params(params)

    # --- small batch (single-block path) ---
    action = jax.random.normal(k_action, (batch, num_actions), jnp.float32)
    q1, q2 = qnetwork_forward(action, packed)
    jax.block_until_ready((q1, q2))
    r1, r2 = _reference_forward(action, params)
    assert q1.shape == (batch, 1) and q2.shape == (batch, 1)
    assert jnp.allclose(q1, r1, atol=ATOL, rtol=RTOL), "head-1 mismatch"
    assert jnp.allclose(q2, r2, atol=ATOL, rtol=RTOL), "head-2 mismatch"

    # --- mid batch (still a single grid step after the tile_b rework) ---
    mid_b = 256
    action_mid = jax.random.normal(k_mid, (mid_b, num_actions), jnp.float32)
    mq1, mq2 = qnetwork_forward(action_mid, packed)
    jax.block_until_ready((mq1, mq2))
    mr1, mr2 = _reference_forward(action_mid, params)
    assert jnp.allclose(mq1, mr1, atol=ATOL, rtol=RTOL), "mid head-1 mismatch"
    assert jnp.allclose(mq2, mr2, atol=ATOL, rtol=RTOL), "mid head-2 mismatch"

    # --- larger, ragged batch (exercises tiled grid + batch padding path) ---
    big_b = 3000
    action_big = jax.random.normal(k_big, (big_b, num_actions), jnp.float32)
    bq1, bq2 = qnetwork_forward(action_big, packed)
    jax.block_until_ready((bq1, bq2))
    br1, br2 = _reference_forward(action_big, params)
    assert bq1.shape == (big_b, 1) and bq2.shape == (big_b, 1)
    assert jnp.allclose(bq1, br1, atol=ATOL, rtol=RTOL), "tiled head-1 mismatch"
    assert jnp.allclose(bq2, br2, atol=ATOL, rtol=RTOL), "tiled head-2 mismatch"

    print("KERNEL_OK")
</pallas_src>

<mosaic_0001>
module attributes {stable_mosaic.version = 11 : i64} {
  func.func @_qnet_kernel(%arg0: i32, %arg1: memref<8x4xf32, #tpu.memory_space<vmem>>, %arg2: memref<4x128xf32, #tpu.memory_space<vmem>>, %arg3: memref<1x128xf32, #tpu.memory_space<vmem>>, %arg4: memref<128x128xbf16, #tpu.memory_space<vmem>>, %arg5: memref<1x128xf32, #tpu.memory_space<vmem>>, %arg6: memref<128x8xbf16, #tpu.memory_space<vmem>>, %arg7: memref<1x8xf32, #tpu.memory_space<vmem>>, %arg8: memref<8x8xf32, #tpu.memory_space<vmem>>) attributes {dimension_semantics = [#tpu.dimension_semantics<parallel>], iteration_bounds = array<i64: 1>, scalar_prefetch = 0 : i64, scratch_operands = 0 : i64, tpu.core_type = #tpu.core_type<tc>, window_params = [{transform_indices = @transform_0, window_bounds = array<i64: 8, 4>}, {pipeline_mode = #tpu.pipeline_mode<synchronous>, transform_indices = @transform_1, window_bounds = array<i64: 4, 128>}, {pipeline_mode = #tpu.pipeline_mode<synchronous>, transform_indices = @transform_2, window_bounds = array<i64: 1, 128>}, {pipeline_mode = #tpu.pipeline_mode<synchronous>, transform_indices = @transform_3, window_bounds = array<i64: 128, 128>}, {pipeline_mode = #tpu.pipeline_mode<synchronous>, transform_indices = @transform_4, window_bounds = array<i64: 1, 128>}, {pipeline_mode = #tpu.pipeline_mode<synchronous>, transform_indices = @transform_5, window_bounds = array<i64: 128, 8>}, {pipeline_mode = #tpu.pipeline_mode<synchronous>, transform_indices = @transform_6, window_bounds = array<i64: 1, 8>}, {transform_indices = @transform_7, window_bounds = array<i64: 8, 8>}]} {
    %c0 = arith.constant 0 : index
    %c0_0 = arith.constant 0 : index
    %0 = vector.load %arg1[%c0, %c0_0] : memref<8x4xf32, #tpu.memory_space<vmem>>, vector<8x4xf32>
    %c0_1 = arith.constant 0 : index
    %c0_2 = arith.constant 0 : index
    %1 = vector.load %arg2[%c0_1, %c0_2] : memref<4x128xf32, #tpu.memory_space<vmem>>, vector<4x128xf32>
    %cst = arith.constant dense<0.000000e+00> : vector<8x128xf32>
    %2 = tpu.matmul %0, %1, %cst {dimension_numbers = #tpu.dot_dimension_numbers<[1], [0], [0], [1], [0, 0, 1, 1], [], []>} : vector<8x4xf32>, vector<4x128xf32>, vector<8x128xf32> -> vector<8x128xf32>
    %c0_3 = arith.constant 0 : index
    %c0_4 = arith.constant 0 : index
    %3 = vector.load %arg3[%c0_3, %c0_4] : memref<1x128xf32, #tpu.memory_space<vmem>>, vector<1x128xf32>
    %4 = vector.broadcast %3 : vector<1x128xf32> to vector<8x128xf32>
    %5 = arith.addf %2, %4 : vector<8x128xf32>
    %cst_5 = arith.constant 0.000000e+00 : f32
    %6 = vector.broadcast %cst_5 : f32 to vector<8x128xf32>
    %7 = arith.maximumf %5, %6 : vector<8x128xf32>
    %8 = arith.truncf %7 : vector<8x128xf32> to vector<8x128xbf16>
    %c0_6 = arith.constant 0 : index
    %c0_7 = arith.constant 0 : index
    %9 = vector.load %arg4[%c0_6, %c0_7] : memref<128x128xbf16, #tpu.memory_space<vmem>>, vector<128x128xbf16>
    %cst_8 = arith.constant dense<0.000000e+00> : vector<8x128xf32>
    %10 = tpu.matmul %8, %9, %cst_8 {dimension_numbers = #tpu.dot_dimension_numbers<[1], [0], [0], [1], [0, 0, 1, 1], [], []>} : vector<8x128xbf16>, vector<128x128xbf16>, vector<8x128xf32> -> vector<8x128xf32>
    %c0_9 = arith.constant 0 : index
    %c0_10 = arith.constant 0 : index
    %11 = vector.load %arg5[%c0_9, %c0_10] : memref<1x128xf32, #tpu.memory_space<vmem>>, vector<1x128xf32>
    %12 = vector.broadcast %11 : vector<1x128xf32> to vector<8x128xf32>
    %13 = arith.addf %10, %12 : vector<8x128xf32>
    %cst_11 = arith.constant 0.000000e+00 : f32
    %14 = vector.broadcast %cst_11 : f32 to vector<8x128xf32>
    %15 = arith.maximumf %13, %14 : vector<8x128xf32>
    %16 = arith.truncf %15 : vector<8x128xf32> to vector<8x128xbf16>
    %c0_12 = arith.constant 0 : index
    %c0_13 = arith.constant 0 : index
    %17 = vector.load %arg6[%c0_12, %c0_13] : memref<128x8xbf16, #tpu.memory_space<vmem>>, vector<128x8xbf16>
    %cst_14 = arith.constant dense<0.000000e+00> : vector<8x8xf32>
    %18 = tpu.matmul %16, %17, %cst_14 {dimension_numbers = #tpu.dot_dimension_numbers<[1], [0], [0], [1], [0, 0, 1, 1], [], []>} : vector<8x128xbf16>, vector<128x8xbf16>, vector<8x8xf32> -> vector<8x8xf32>
    %c0_15 = arith.constant 0 : index
    %c0_16 = arith.constant 0 : index
    %19 = vector.load %arg7[%c0_15, %c0_16] : memref<1x8xf32, #tpu.memory_space<vmem>>, vector<1x8xf32>
    %20 = vector.broadcast %19 : vector<1x8xf32> to vector<8x8xf32>
    %21 = arith.addf %18, %20 : vector<8x8xf32>
    %c0_17 = arith.constant 0 : index
    %c0_18 = arith.constant 0 : index
    %22 = vector.load %arg8[%c0_17, %c0_18] : memref<8x8xf32, #tpu.memory_space<vmem>>, vector<8x8xf32>
    tpu.vector_store %arg8[%c0_17, %c0_18], %21 {strides = array<i32>} : memref<8x8xf32, #tpu.memory_space<vmem>>, vector<8x8xf32>,
    return
  }
  func.func @transform_0(%arg0: i32) -> (i32, i32) {
    %c0_i32 = arith.constant 0 : i32
    %c0_i32_0 = arith.constant 0 : i32
    return %arg0, %c0_i32 : i32, i32
  }
  func.func @transform_1(%arg0: i32) -> (i32, i32) {
    %c0_i32 = arith.constant 0 : i32
    %c0_i32_0 = arith.constant 0 : i32
    %c0_i32_1 = arith.constant 0 : i32
    return %c0_i32, %c0_i32_0 : i32, i32
  }
  func.func @transform_2(%arg0: i32) -> (i32, i32) {
    %c0_i32 = arith.constant 0 : i32
    %c0_i32_0 = arith.constant 0 : i32
    %c0_i32_1 = arith.constant 0 : i32
    return %c0_i32, %c0_i32_0 : i32, i32
  }
  func.func @transform_3(%arg0: i32) -> (i32, i32) {
    %c0_i32 = arith.constant 0 : i32
    %c0_i32_0 = arith.constant 0 : i32
    %c0_i32_1 = arith.constant 0 : i32
    return %c0_i32, %c0_i32_0 : i32, i32
  }
  func.func @transform_4(%arg0: i32) -> (i32, i32) {
    %c0_i32 = arith.constant 0 : i32
    %c0_i32_0 = arith.constant 0 : i32
    %c0_i32_1 = arith.constant 0 : i32
    return %c0_i32, %c0_i32_0 : i32, i32
  }
  func.func @transform_5(%arg0: i32) -> (i32, i32) {
    %c0_i32 = arith.constant 0 : i32
    %c0_i32_0 = arith.constant 0 : i32
    %c0_i32_1 = arith.constant 0 : i32
    return %c0_i32, %c0_i32_0 : i32, i32
  }
  func.func @transform_6(%arg0: i32) -> (i32, i32) {
    %c0_i32 = arith.constant 0 : i32
    %c0_i32_0 = arith.constant 0 : i32
    %c0_i32_1 = arith.constant 0 : i32
    return %c0_i32, %c0_i32_0 : i32, i32
  }
  func.func @transform_7(%arg0: i32) -> (i32, i32) {
    %c0_i32 = arith.constant 0 : i32
    %c0_i32_0 = arith.constant 0 : i32
    return %arg0, %c0_i32 : i32, i32
  }
}

</mosaic_0001>

<llo_original>
// kernel: tpu_custom_call.1
$region0: #{tpu_custom_call.1}
  #allocation0 [shape = 'u32[]', space=smem, size = 0x4, offset = 0x4, fixed_abs, tag = 'smem constant byte address 0x4 - core index']
  #allocation1 [shape = 'u32[144,128]{1,0:T(1,128)}', space=vmem, size = 0x12000, scoped, tag = 'internal scratch']
  %s0 = inlined_call_operand.vmem [shape: f32[8,4], index: 0, kind: input, shape index: {}]
  %s1 = inlined_call_operand.vmem [shape: f32[4,128], index: 1, kind: input, shape index: {}]
  %s2 = inlined_call_operand.vmem [shape: f32[1,128], index: 2, kind: input, shape index: {}]
  %s3 = inlined_call_operand.vmem [shape: bf16[128,128], index: 3, kind: input, shape index: {}]
  %s4 = inlined_call_operand.vmem [shape: f32[1,128], index: 4, kind: input, shape index: {}]
  %s5 = inlined_call_operand.vmem [shape: bf16[128,8], index: 5, kind: input, shape index: {}]
  %s6 = inlined_call_operand.vmem [shape: f32[1,8], index: 6, kind: input, shape index: {}]
  %s7 = inlined_call_operand.hbm [shape: f32[8,8], index: 7, kind: output, shape index: {}]
  %s8 = sld [smem:[#allocation0]]
  $region38: #{tpu_custom_call.1} parent=0
    _
  %s10 = ssub.s32 1, %s8
  %s11 = scalar_select 0, %s10, %s8
  $region1: #{tpu_custom_call.1} parent=0
    #allocation2 [shape = 'u8[4096]{0}', space=vmem, size = 0x1000, scoped, tag = 'output window, operand 0, single buffered']
    #allocation3 [shape = 's32[1]{0}', space=sflag, size = 0x4, scoped, tag = 'scoped memory for tpu_custom_call.1']
    %12 = vsyncpa [#allocation3], 0
    // Predicated region
    $region2: #{tpu_custom_call.1} parent=1 // pred_check
      _
    $region3: #{tpu_custom_call.1} parent=1 // pred_check_branch
      %14 = sbr.rel (0) target = $region5
    $region4: #{tpu_custom_call.1} parent=1 // pred_region
      _
    $region5: #{tpu_custom_call.1} parent=1 // pred_fallthru
      _
    // Predicated region
    $region6: #{tpu_custom_call.1} parent=1 // pred_check
      _
    $region7: #{tpu_custom_call.1} parent=1 // pred_check_branch
      %16 = sbr.rel (0) target = $region9
    $region8: #{tpu_custom_call.1} parent=1 // pred_region
      _
    $region9: #{tpu_custom_call.1} parent=1 // pred_fallthru
      _
    // Predicated region
    $region10: #{tpu_custom_call.1} parent=1 // pred_check
      _
    $region11: #{tpu_custom_call.1} parent=1 // pred_check_branch
      %18 = sbr.rel (0) target = $region13
    $region12: #{tpu_custom_call.1} parent=1 // pred_region
      _
    $region13: #{tpu_custom_call.1} parent=1 // pred_fallthru
      _
    // Predicated region
    $region14: #{tpu_custom_call.1} parent=1 // pred_check
      _
    $region15: #{tpu_custom_call.1} parent=1 // pred_check_branch
      %20 = sbr.rel (0) target = $region17
    $region16: #{tpu_custom_call.1} parent=1 // pred_region
      _
    $region17: #{tpu_custom_call.1} parent=1 // pred_fallthru
      _
    // Predicated region
    $region18: #{tpu_custom_call.1} parent=1 // pred_check
      _
    $region19: #{tpu_custom_call.1} parent=1 // pred_check_branch
      %22 = sbr.rel (0) target = $region21
    $region20: #{tpu_custom_call.1} parent=1 // pred_region
      _
    $region21: #{tpu_custom_call.1} parent=1 // pred_fallthru
      _
    // Predicated region
    $region22: #{tpu_custom_call.1} parent=1 // pred_check
      _
    $region23: #{tpu_custom_call.1} parent=1 // pred_check_branch
      %24 = sbr.rel (0) target = $region25
    $region24: #{tpu_custom_call.1} parent=1 // pred_region
      _
    $region25: #{tpu_custom_call.1} parent=1 // pred_fallthru
      _
    // Predicated region
    $region26: #{tpu_custom_call.1} parent=1 // pred_check
      _
    $region27: #{tpu_custom_call.1} parent=1 // pred_check_branch
      %26 = sbr.rel (0) target = $region29
    $region28: #{tpu_custom_call.1} parent=1 // pred_region
      _
    $region29: #{tpu_custom_call.1} parent=1 // pred_fallthru
      _
    %v28 = vld [vmem:[%s0] sm:$0xff]
    %v29 = vld [vmem:[%s1] sm:$0xf]
    %v30 = vld [vmem:[%s2] sm:$0x1]
    %v32 = vlaneseq
    %v33 = vshrl.u32 %v32, 7
    %v34 = vsub.s32 0, %v33
    %v35 = vrot.slane %v30, %v34
    %vm37 = vcmask 31744
    %v39 = vsel %vm37, %v28, 0
    %vm41 = vcmask 1043456
    %v43 = vsel %vm41, %v29, 0
    %45 = vmatprep.subr.mxu0 0.0
    %46 = vmatpush1.msra.mxu0 0.0
    %47 = vmatprep.subr.mxu0 0.0
    %48 = vmatpush1.msra.mxu0 0.0
    %49 = vmatprep.subr.mxu0 0.0
    %50 = vmatpush1.msra.mxu0 0.0
    %51 = vmatprep.subr.mxu0 0.0
    %52 = vmatpush1.msra.mxu0 0.0
    %53 = vmatprep.subr.mxu0 0.0
    %54 = vmatpush1.msra.mxu0 0.0
    %55 = vmatprep.subr.mxu0 0.0
    %56 = vmatpush1.msra.mxu0 0.0
    %57 = vmatprep.subr.mxu0 0.0
    %58 = vmatpush1.msra.mxu0 0.0
    %59 = vmatprep.subr.mxu0 0.0
    %60 = vmatpush1.msra.mxu0 0.0
    %61 = vmatprep.subr.mxu0 0.0
    %62 = vmatpush1.msra.mxu0 0.0
    %63 = vmatprep.subr.mxu0 0.0
    %64 = vmatpush1.msra.mxu0 0.0
    %65 = vmatprep.subr.mxu0 0.0
    %66 = vmatpush1.msra.mxu0 0.0
    %67 = vmatprep.subr.mxu0 0.0
    %68 = vmatpush1.msra.mxu0 0.0
    %69 = vmatprep.subr.mxu0 0.0
    %70 = vmatpush1.msra.mxu0 0.0
    %71 = vmatprep.subr.mxu0 0.0
    %72 = vmatpush1.msra.mxu0 0.0
    %73 = vmatprep.subr.mxu0 0.0
    %74 = vmatpush1.msra.mxu0 0.0
    %75 = vmatprep.subr.mxu0 0.0
    %76 = vmatpush1.msra.mxu0 %v43
    %77 = vmatprep.subr.mxu0 0.0
    %78 = vmatpush2.msra.mxu0 0.0
    %79 = vmatprep.subr.mxu0 0.0
    %80 = vmatpush2.msra.mxu0 0.0
    %81 = vmatprep.subr.mxu0 0.0
    %82 = vmatpush2.msra.mxu0 0.0
    %83 = vmatprep.subr.mxu0 0.0
    %84 = vmatpush2.msra.mxu0 0.0
    %85 = vmatprep.subr.mxu0 0.0
    %86 = vmatpush2.msra.mxu0 0.0
    %87 = vmatprep.subr.mxu0 0.0
    %88 = vmatpush2.msra.mxu0 0.0
    %89 = vmatprep.subr.mxu0 0.0
    %90 = vmatpush2.msra.mxu0 0.0
    %91 = vmatprep.subr.mxu0 0.0
    %92 = vmatpush2.msra.mxu0 0.0
    %93 = vmatprep.subr.mxu0 0.0
    %94 = vmatpush2.msra.mxu0 0.0
    %95 = vmatprep.subr.mxu0 0.0
    %96 = vmatpush2.msra.mxu0 0.0
    %97 = vmatprep.subr.mxu0 0.0
    %98 = vmatpush2.msra.mxu0 0.0
    %99 = vmatprep.subr.mxu0 0.0
    %100 = vmatpush2.msra.mxu0 0.0
    %101 = vmatprep.subr.mxu0 0.0
    %102 = vmatpush2.msra.mxu0 0.0
    %103 = vmatprep.subr.mxu0 0.0
    %104 = vmatpush2.msra.mxu0 0.0
    %105 = vmatprep.subr.mxu0 0.0
    %106 = vmatpush2.msra.mxu0 0.0
    %107 = vmatprep.subr.mxu0 0.0
    %108 = vmatpush2.msra.mxu0 0.0
    %109 = vmatprep.mubr.f32.mxu0 0.0
    %110 = vmatmul.mubr.f32.gmra.mxu0 %v39
    %v111 = vpop.f32.mrf.mxu0
    %v112 = vadd.f32 %v35, %v111
    %v113 = vpop.f32.mrf.mxu0
    %114 = vdwg.mxu0
    %v115 = vmax.f32 %v112, 0.0
    %v116 = vpack.c.bf16 %v115, %v115
    %v117 = vld [vmem:[%s3] sm:$0xf]
    %v118 = vld [vmem:[%s3 + $0x4] sm:$0xf]
    %v119 = vld [vmem:[%s3 + $0x8] sm:$0xf]
    %v120 = vld [vmem:[%s3 + $0xc] sm:$0xf]
    %v121 = vld [vmem:[%s3 + $0x10] sm:$0xf]
    %v122 = vld [vmem:[%s3 + $0x14] sm:$0xf]
    %v123 = vld [vmem:[%s3 + $0x18] sm:$0xf]
    %v124 = vld [vmem:[%s3 + $0x1c] sm:$0xf]
    %v125 = vld [vmem:[%s3 + $0x20] sm:$0xf]
    %v126 = vld [vmem:[%s3 + $0x24] sm:$0xf]
    %v127 = vld [vmem:[%s3 + $0x28] sm:$0xf]
    %v128 = vld [vmem:[%s3 + $0x2c] sm:$0xf]
    %v129 = vld [vmem:[%s3 + $0x30] sm:$0xf]
    %v130 = vld [vmem:[%s3 + $0x34] sm:$0xf]
    %v131 = vld [vmem:[%s3 + $0x38] sm:$0xf]
    %v132 = vld [vmem:[%s3 + $0x3c] sm:$0xf]
    %v133 = vld [vmem:[%s4] sm:$0x1]
    %v135 = vlaneseq
    %v136 = vshrl.u32 %v135, 7
    %v137 = vsub.s32 0, %v136
    %v138 = vrot.slane %v133, %v137
    %v156 = vunpack.c.l.b16 %v117
    %v157 = vunpack.c.l.b16 %v118
    %v158 = vunpack.c.l.b16 %v119
    %v159 = vunpack.c.l.b16 %v120
    %v160 = vunpack.c.l.b16 %v121
    %v161 = vunpack.c.l.b16 %v122
    %v162 = vunpack.c.l.b16 %v123
    %v163 = vunpack.c.l.b16 %v124
    %v164 = vunpack.c.l.b16 %v125
    %v165 = vunpack.c.l.b16 %v126
    %v166 = vunpack.c.l.b16 %v127
    %v167 = vunpack.c.l.b16 %v128
    %v168 = vunpack.c.l.b16 %v129
    %v169 = vunpack.c.l.b16 %v130
    %v170 = vunpack.c.l.b16 %v131
    %v171 = vunpack.c.l.b16 %v132
    %v172 = vpack.c.b16 %v157, %v156
    %v173 = vpack.c.b16 %v159, %v158
    %v174 = vpack.c.b16 %v161, %v160
    %v175 = vpack.c.b16 %v163, %v162
    %v176 = vpack.c.b16 %v165, %v164
    %v177 = vpack.c.b16 %v167, %v166
    %v178 = vpack.c.b16 %v169, %v168
    %v179 = vpack.c.b16 %v171, %v170
    %188 = vmatprep.subr.bf16.mxu0 0
    %189 = vmatpush1.bf16.msra.mxu0 %v179
    %190 = vmatprep.subr.bf16.mxu0 0
    %191 = vmatpush1.bf16.msra.mxu0 %v178
    %192 = vmatprep.subr.bf16.mxu0 0
    %193 = vmatpush1.bf16.msra.mxu0 %v177
    %194 = vmatprep.subr.bf16.mxu0 0
    %195 = vmatpush1.bf16.msra.mxu0 %v176
    %196 = vmatprep.subr.bf16.mxu0 0
    %197 = vmatpush1.bf16.msra.mxu0 %v175
    %198 = vmatprep.subr.bf16.mxu0 0
    %199 = vmatpush1.bf16.msra.mxu0 %v174
    %200 = vmatprep.subr.bf16.mxu0 0
    %201 = vmatpush1.bf16.msra.mxu0 %v173
    %202 = vmatprep.subr.bf16.mxu0 0
    %203 = vmatpush1.bf16.msra.mxu0 %v172
    %204 = vmatprep.subr.bf16.mxu0 0
    %205 = vmatpush2.bf16.msra.mxu0 0
    %206 = vmatprep.subr.bf16.mxu0 0
    %207 = vmatpush2.bf16.msra.mxu0 0
    %208 = vmatprep.subr.bf16.mxu0 0
    %209 = vmatpush2.bf16.msra.mxu0 0
    %210 = vmatprep.subr.bf16.mxu0 0
    %211 = vmatpush2.bf16.msra.mxu0 0
    %212 = vmatprep.subr.bf16.mxu0 0
    %213 = vmatpush2.bf16.msra.mxu0 0
    %214 = vmatprep.subr.bf16.mxu0 0
    %215 = vmatpush2.bf16.msra.mxu0 0
    %216 = vmatprep.subr.bf16.mxu0 0
    %217 = vmatpush2.bf16.msra.mxu0 0
    %218 = vmatprep.subr.bf16.mxu0 0
    %219 = vmatpush2.bf16.msra.mxu0 0
    %220 = vmatprep.mubr.bf16.mxu0 0
    %221 = vmatmul.mubr.bf16.gmra.mxu0 %v116
    %v222 = vpop.f32.mrf.mxu0
    %v223 = vadd.f32 %v138, %v222
    %v224 = vpop.f32.mrf.mxu0
    %v225 = vpop.f32.mrf.mxu0
    %v226 = vpop.f32.mrf.mxu0
    %227 = vdwg.mxu0
    %v228 = vmax.f32 %v223, 0.0
    %v229 = vpack.c.bf16 %v228, %v228
    %v230 = vld [vmem:[%s5] sm:$0xf]
    %v231 = vld [vmem:[%s5 + $0x4] sm:$0xf]
    %v232 = vld [vmem:[%s5 + $0x8] sm:$0xf]
    %v233 = vld [vmem:[%s5 + $0xc] sm:$0xf]
    %v234 = vld [vmem:[%s5 + $0x10] sm:$0xf]
    %v235 = vld [vmem:[%s5 + $0x14] sm:$0xf]
    %v236 = vld [vmem:[%s5 + $0x18] sm:$0xf]
    %v237 = vld [vmem:[%s5 + $0x1c] sm:$0xf]
    %v238 = vld [vmem:[%s5 + $0x20] sm:$0xf]
    %v239 = vld [vmem:[%s5 + $0x24] sm:$0xf]
    %v240 = vld [vmem:[%s5 + $0x28] sm:$0xf]
    %v241 = vld [vmem:[%s5 + $0x2c] sm:$0xf]
    %v242 = vld [vmem:[%s5 + $0x30] sm:$0xf]
    %v243 = vld [vmem:[%s5 + $0x34] sm:$0xf]
    %v244 = vld [vmem:[%s5 + $0x38] sm:$0xf]
    %v245 = vld [vmem:[%s5 + $0x3c] sm:$0xf]
    %v246 = vld [vmem:[%s6] sm:$0x1]
    %v248 = vlaneseq
    %v249 = vshrl.u32 %v248, 7
    %v250 = vsub.s32 0, %v249
    %v251 = vrot.slane %v246, %v250
    %v269 = vunpack.c.l.b16 %v230
    %v270 = vunpack.c.l.b16 %v231
    %v271 = vunpack.c.l.b16 %v232
    %v272 = vunpack.c.l.b16 %v233
    %v273 = vunpack.c.l.b16 %v234
    %v274 = vunpack.c.l.b16 %v235
    %v275 = vunpack.c.l.b16 %v236
    %v276 = vunpack.c.l.b16 %v237
    %v277 = vunpack.c.l.b16 %v238
    %v278 = vunpack.c.l.b16 %v239
    %v279 = vunpack.c.l.b16 %v240
    %v280 = vunpack.c.l.b16 %v241
    %v281 = vunpack.c.l.b16 %v242
    %v282 = vunpack.c.l.b16 %v243
    %v283 = vunpack.c.l.b16 %v244
    %v284 = vunpack.c.l.b16 %v245
    %v285 = vpack.c.b16 %v270, %v269
    %v286 = vpack.c.b16 %v272, %v271
    %v287 = vpack.c.b16 %v274, %v273
    %v288 = vpack.c.b16 %v276, %v275
    %v289 = vpack.c.b16 %v278, %v277
    %v290 = vpack.c.b16 %v280, %v279
    %v291 = vpack.c.b16 %v282, %v281
    %v292 = vpack.c.b16 %v284, %v283
    %301 = vmatprep.subr.bf16.mxu0 0
    %302 = vmatpush1.bf16.msra.mxu0 %v292
    %303 = vmatprep.subr.bf16.mxu0 0
    %304 = vmatpush1.bf16.msra.mxu0 %v291
    %305 = vmatprep.subr.bf16.mxu0 0
    %306 = vmatpush1.bf16.msra.mxu0 %v290
    %307 = vmatprep.subr.bf16.mxu0 0
    %308 = vmatpush1.bf16.msra.mxu0 %v289
    %309 = vmatprep.subr.bf16.mxu0 0
    %310 = vmatpush1.bf16.msra.mxu0 %v288
    %311 = vmatprep.subr.bf16.mxu0 0
    %312 = vmatpush1.bf16.msra.mxu0 %v287
    %313 = vmatprep.subr.bf16.mxu0 0
    %314 = vmatpush1.bf16.msra.mxu0 %v286
    %315 = vmatprep.subr.bf16.mxu0 0
    %316 = vmatpush1.bf16.msra.mxu0 %v285
    %317 = vmatprep.subr.bf16.mxu0 0
    %318 = vmatpush2.bf16.msra.mxu0 0
    %319 = vmatprep.subr.bf16.mxu0 0
    %320 = vmatpush2.bf16.msra.mxu0 0
    %321 = vmatprep.subr.bf16.mxu0 0
    %322 = vmatpush2.bf16.msra.mxu0 0
    %323 = vmatprep.subr.bf16.mxu0 0
    %324 = vmatpush2.bf16.msra.mxu0 0
    %325 = vmatprep.subr.bf16.mxu0 0
    %326 = vmatpush2.bf16.msra.mxu0 0
    %327 = vmatprep.subr.bf16.mxu0 0
    %328 = vmatpush2.bf16.msra.mxu0 0
    %329 = vmatprep.subr.bf16.mxu0 0
    %330 = vmatpush2.bf16.msra.mxu0 0
    %331 = vmatprep.subr.bf16.mxu0 0
    %332 = vmatpush2.bf16.msra.mxu0 0
    %333 = vmatprep.mubr.bf16.mxu0 0
    %334 = vmatmul.mubr.bf16.gmra.mxu0 %v229
    %v335 = vpop.f32.mrf.mxu0
    %v336 = vadd.f32 %v251, %v335
    %v337 = vpop.f32.mrf.mxu0
    %v338 = vpop.f32.mrf.mxu0
    %v339 = vpop.f32.mrf.mxu0
    %340 = vdwg.mxu0
    %vm341 = vcmask 64512
    %342 = vst.msk [vmem:[#allocation2] sm:$0xff] %vm341, %v336
    // Predicated region
    $region30: #{tpu_custom_call.1} parent=1 // pred_check
      _
    $region31: #{tpu_custom_call.1} parent=1 // pred_check_branch
      %344 = sbr.rel (0) target = $region33
    $region32: #{tpu_custom_call.1} parent=1 // pred_region
      %s346 = ssub.s32 128, 128
      %347 = vsyncadd [#allocation3], %s346
      %s349 = sshll.u32 [#allocation2], 4
      %s350 = int_to_ptr.vmem [resolvable:$true] %s349
      %352 = dma.vmem_to_hbm [thread:$0]  %s350, 128, %s7, [#allocation3]
    $region33: #{tpu_custom_call.1} parent=1 // pred_fallthru
      _
    // Predicated region
    $region34: #{tpu_custom_call.1} parent=1 // pred_check
      _
    $region35: #{tpu_custom_call.1} parent=1 // pred_check_branch
      %354 = sbr.rel (0) target = $region37
    $region36: #{tpu_custom_call.1} parent=1 // pred_region
      %355 = dma.done [#allocation3], 128
    $region37: #{tpu_custom_call.1} parent=1 // pred_fallthru
      _
    %356 = vsyncpa [#allocation3], 1

</llo_original>
